<compile_context>
chip_gen: v6e
topology: v6e:2x2x1
jax: 0.10.0
libtpu: 0.0.40
codegen_flags: <defaults>
</compile_context>

<pallas_src>
import numpy as np
import jax
import jax.numpy as jnp
from jax import lax
from jax.experimental import pallas as pl
from jax.experimental.pallas import tpu as pltpu


def _make_kernel(doc_row):
    """doc_row: static sublane row (== max_sents) that holds the doc/EOS rep."""

    def kernel(tok_ref,   # (Bt, T, 1)   int32  token ids
               sid_ref,   # (Bt, 1, T)   int32  per-token sentence id (-1 = none)
               doc_ref,   # (Bt, 1, T)   f32    one-hot at the last_token_pool index
               inv_ref,   # (Bt, SP, 1)  f32    1/len(sentence) per mask row (0 if empty)
               emb_ref,   # (Vp, D)      bf16   embedding table (resident)
               w_ref,     # (D, D)       bf16   encoder weight   (resident)
               b_ref,     # (1, D)       f32    encoder bias     (resident)
               out_ref):  # (Bt, SP, D)  f32    pooled reps
        Bt, T, _ = tok_ref.shape
        SP = out_ref.shape[1]
        Vp, D = emb_ref.shape

        # ---- in-kernel embedding gather: one-hot(tok) @ table on the MXU. ----
        # Exactly reproduces emb[tok_ids] (a one-hot row select is exact in
        # bf16 x bf16 -> f32) with no (B, T, D) HBM intermediate.
        # TODO(synk): at real Qwen2 vocab/dim (150K x 1536) the table does not
        #             fit VMEM; switch to scalar-prefetched tok_ids + per-row
        #             DMA gather from emb kept at memory_space=pl.ANY.
        ids = tok_ref[...]                                            # (Bt, T, 1)
        viota = lax.broadcasted_iota(jnp.int32, (Bt, T, Vp), 2)
        onehot = (viota == ids).astype(jnp.bfloat16)                  # (Bt, T, Vp)
        x_bf = jnp.dot(onehot.reshape(Bt * T, Vp), emb_ref[...],
                       preferred_element_type=jnp.float32
                       ).astype(jnp.bfloat16)                         # (Bt*T, D)

        # ---- stand-in encoder layer: H = tanh(X @ W + b), bf16 in / f32 acc. ----
        h = jnp.tanh(jnp.dot(x_bf, w_ref[...],
                             preferred_element_type=jnp.float32) + b_ref[...])
        h_bf = h.astype(jnp.bfloat16).reshape(Bt, T, D)

        # ---- build the scaled pooling mask in-register (bf16). ----
        # Rows 0..S-1: 1/len(sent) at that sentence's token positions
        #              (masked mean folded into the matmul),
        # row S      : one-hot at the doc index (last_token_pool),
        # rows S+1.. : zero padding to a multiple of 8 sublanes.
        row = lax.broadcasted_iota(jnp.int32, (Bt, SP, T), 1)
        sent_mask = (row == sid_ref[...]).astype(jnp.float32) * inv_ref[...]
        doc_mask = (row == doc_row).astype(jnp.float32) * doc_ref[...]
        mask_bf = (sent_mask + doc_mask).astype(jnp.bfloat16)         # (Bt, SP, T)

        # ---- fused pooling: sentence means + doc/EOS rep in one MXU pass. ----
        out_ref[...] = jnp.einsum('bst,btd->bsd', mask_bf, h_bf,
                                  preferred_element_type=jnp.float32)

    return kernel


_VMEM_BUDGET_BYTES = 40 * 1024 * 1024   # conservative: leaves headroom on v7x (64 MiB physical)


def _estimate_vmem_bytes(Bt, T, D, SP, Vp):
    """Rough per-grid-step VMEM footprint: double-buffered tiles + resident
    weights + compiler-allocated intermediates."""
    rows = Bt * T
    resident = Vp * D * 2 + D * D * 2 + D * 4                 # emb, W (bf16), bias
    streamed = 2 * (rows * 4                                   # token ids
                    + Bt * T * 4                               # sentence ids
                    + Bt * T * 4                               # doc one-hot
                    + Bt * SP * 4                              # inv counts
                    + Bt * SP * D * 4)                         # out tile (f32)
    interm = (rows * Vp * 2                                    # one-hot (bf16)
              + rows * D * 4                                   # f32 matmul acc / h
              + rows * D * 2                                   # h (bf16)
              + Bt * SP * T * 2                                # mask (bf16)
              + Bt * SP * D * 4)                               # pooling acc
    return resident + streamed + interm


def _pick_batch_tile(B, T, D, SP, Vp):
    """Largest divisor of B that fits the VMEM budget; capped at B//2 so the
    'parallel' grid axis has >= 2 steps (both v7x TensorCores get work)."""
    cap = B if B < 2 else max(1, B // 2)
    best = 1
    for bt in range(1, cap + 1):
        if B % bt == 0 and 1.5 * _estimate_vmem_bytes(bt, T, D, SP, Vp) <= _VMEM_BUDGET_BYTES:
            best = bt
    return best


def _vmem_limit_bytes(Bt, T, D, SP, Vp):
    est = int(1.5 * _estimate_vmem_bytes(Bt, T, D, SP, Vp)) + (4 << 20)
    return min(48 << 20, max(16 << 20, est))


def aspire_forward(tok_ids, attn_mask, sent_tok_idxs, emb, W, bvec, max_sents):
    """Glue: compact sentence/doc metadata, weight casts, pallas_call."""
    B, T = tok_ids.shape
    V, D = emb.shape
    S = max_sents
    SP = max(8, ((S + 1 + 7) // 8) * 8)      # S sentence rows + doc row, padded to 8 sublanes
    Vp = ((V + 127) // 128) * 128            # vocab padded to a lane multiple

    # ---- last_token_pool index logic (host side; attn_mask is concrete,
    #      mirroring the module's Python branch on left padding). ----
    attn_np = np.asarray(attn_mask).astype(np.int64)
    left_padding = int(attn_np[:, -1].sum()) == B
    if left_padding:
        doc_idx = np.full((B,), T - 1, dtype=np.int64)
    else:
        doc_idx = attn_np.sum(axis=1) - 1

    # ---- compact per-token metadata (replaces the dense (B, SP, T) f32 mask).
    #      Assumes each token belongs to at most one sentence (Aspire semantics). ----
    sid_np = np.full((B, T), -1, dtype=np.int32)
    inv_np = np.zeros((B, SP), dtype=np.float32)
    doc_np = np.zeros((B, T), dtype=np.float32)
    for bi in range(B):
        for si, idxs in enumerate(sent_tok_idxs[bi]):
            if si >= S or len(idxs) == 0:
                continue
            sid_np[bi, np.asarray(idxs, dtype=np.int64)] = si
            inv_np[bi, si] = 1.0 / len(idxs)
        doc_np[bi, doc_idx[bi]] = 1.0            # last_token_pool one-hot

    tok3 = jnp.asarray(np.asarray(tok_ids).astype(np.int32).reshape(B, T, 1))
    sid3 = jnp.asarray(sid_np.reshape(B, 1, T))
    doc3 = jnp.asarray(doc_np.reshape(B, 1, T))
    inv3 = jnp.asarray(inv_np.reshape(B, SP, 1))

    emb_pad = np.zeros((Vp, D), dtype=np.float32)
    emb_pad[:V] = np.asarray(emb)
    emb_bf = jnp.asarray(emb_pad).astype(jnp.bfloat16)
    W_bf = W.astype(jnp.bfloat16)
    bias2d = bvec.reshape(1, D).astype(jnp.float32)

    Bt = _pick_batch_tile(B, T, D, SP, Vp)
    grid = (B // Bt,)

    # TODO(synk): at real Qwen2-scale T/D, add a T-chunk reduction grid axis
    #             ('arbitrary') with an (Bt, SP, D) f32 scratch accumulator so
    #             the h intermediate only ever exists as (Bt*Tk, D).
    out = pl.pallas_call(
        _make_kernel(doc_row=S),
        grid=grid,
        in_specs=[
            pl.BlockSpec((Bt, T, 1),  lambda i: (i, 0, 0)),   # token ids
            pl.BlockSpec((Bt, 1, T),  lambda i: (i, 0, 0)),   # sentence ids
            pl.BlockSpec((Bt, 1, T),  lambda i: (i, 0, 0)),   # doc one-hot
            pl.BlockSpec((Bt, SP, 1), lambda i: (i, 0, 0)),   # 1/len(sentence)
            pl.BlockSpec((Vp, D),     lambda i: (0, 0)),      # embedding table (resident)
            pl.BlockSpec((D, D),      lambda i: (0, 0)),      # encoder weight  (resident)
            pl.BlockSpec((1, D),      lambda i: (0, 0)),      # encoder bias    (resident)
        ],
        out_specs=pl.BlockSpec((Bt, SP, D), lambda i: (i, 0, 0)),
        out_shape=jax.ShapeDtypeStruct((B, SP, D), jnp.float32),
        compiler_params=pltpu.CompilerParams(
            dimension_semantics=("parallel",),
            vmem_limit_bytes=_vmem_limit_bytes(Bt, T, D, SP, Vp)),
    )(tok3, sid3, doc3, inv3, emb_bf, W_bf, bias2d)

    doc_reps = out[:, S, :]       # last_token_pool row
    sent_reps = out[:, :S, :]     # per-sentence masked means
    return doc_reps, sent_reps


def _reference(tok_ids, attn_mask, sent_tok_idxs, emb, W, bvec, max_sents):
    """Pure-JAX reference of the same pooling math (bf16 encoder operands,
    mirroring the original module's bf16 encoder; pooling in f32)."""
    B, T = tok_ids.shape
    D = emb.shape[1]
    S = max_sents

    x = emb[tok_ids].astype(jnp.bfloat16)
    h = jnp.tanh(
        jnp.einsum('btd,de->bte', x, W.astype(jnp.bfloat16),
                   preferred_element_type=jnp.float32)
        + bvec[None, None, :].astype(jnp.float32))

    attn = attn_mask.astype(jnp.int32)
    left_padding = jnp.sum(attn[:, -1]) == B
    seq_len = jnp.sum(attn, axis=1) - 1
    doc_idx = jnp.where(left_padding, jnp.full((B,), T - 1, jnp.int32),
                        seq_len.astype(jnp.int32))
    doc = h[jnp.arange(B), doc_idx]

    mask_np = np.zeros((B, S, T), dtype=np.float32)
    for bi in range(B):
        for si, idxs in enumerate(sent_tok_idxs[bi]):
            if si < S and len(idxs) > 0:
                mask_np[bi, si, np.asarray(idxs, dtype=np.int64)] = 1.0
    m = jnp.asarray(mask_np)
    sums = jnp.einsum('bst,btd->bsd', m, h)
    counts = jnp.maximum(m.sum(-1, keepdims=True), 1.0)
    return doc, sums / counts


if __name__ == "__main__":
    B, T, D, S = 2, 128, 128, 4          # batch, seq (lane-dense), hidden, max sentences
    VOCAB = 64

    key = jax.random.PRNGKey(0)
    k_emb, k_w, k_b, k_tok = jax.random.split(key, 4)

    emb = jax.random.normal(k_emb, (VOCAB, D), dtype=jnp.float32) * 0.1
    W = jax.random.normal(k_w, (D, D), dtype=jnp.float32) * 0.05
    bvec = jax.random.normal(k_b, (D,), dtype=jnp.float32) * 0.01

    tok_ids = jax.random.randint(k_tok, (B, T), 0, VOCAB, dtype=jnp.int32)

    # Right-padded attention masks with seq lens 100 and 77.
    seq_lens = [100, 77]
    attn_np = np.zeros((B, T), dtype=np.int32)
    for bi, L in enumerate(seq_lens):
        attn_np[bi, :L] = 1
    attn_mask = jnp.asarray(attn_np)

    # Sentence -> token-index lists (ragged, per the PyTorch module).
    sent_tok_idxs = [
        [[1, 2, 3], [4, 5, 6, 7], [8, 9, 10, 11, 12]],              # 3 sentences
        [[1, 2], [3, 4, 5], [6, 7, 8, 9], [10, 11, 12, 13, 14]],    # 4 sentences
    ]

    doc_reps, sent_reps = aspire_forward(
        tok_ids, attn_mask, sent_tok_idxs, emb, W, bvec, max_sents=S)
    jax.block_until_ready((doc_reps, sent_reps))

    ref_doc, ref_sent = _reference(tok_ids, attn_mask, sent_tok_idxs,
                                   emb, W, bvec, max_sents=S)

    assert doc_reps.shape == (B, D) and sent_reps.shape == (B, S, D)
    np.testing.assert_allclose(np.asarray(doc_reps), np.asarray(ref_doc),
                               rtol=1e-2, atol=1e-2)
    np.testing.assert_allclose(np.asarray(sent_reps), np.asarray(ref_sent),
                               rtol=1e-2, atol=1e-2)
    print("KERNEL_OK")
</pallas_src>

<mosaic_0001>
module attributes {stable_mosaic.version = 11 : i64} {
  func.func @kernel(%arg0: i32, %arg1: memref<1x128x1xi32, #tpu.memory_space<vmem>>, %arg2: memref<1x1x128xi32, #tpu.memory_space<vmem>>, %arg3: memref<1x1x128xf32, #tpu.memory_space<vmem>>, %arg4: memref<1x8x1xf32, #tpu.memory_space<vmem>>, %arg5: memref<128x128xbf16, #tpu.memory_space<vmem>>, %arg6: memref<128x128xbf16, #tpu.memory_space<vmem>>, %arg7: memref<1x128xf32, #tpu.memory_space<vmem>>, %arg8: memref<1x8x128xf32, #tpu.memory_space<vmem>>) attributes {dimension_semantics = [#tpu.dimension_semantics<parallel>], iteration_bounds = array<i64: 2>, scalar_prefetch = 0 : i64, scratch_operands = 0 : i64, tpu.core_type = #tpu.core_type<tc>, window_params = [{transform_indices = @transform_0, window_bounds = array<i64: 1, 128, 1>}, {transform_indices = @transform_1, window_bounds = array<i64: 1, 1, 128>}, {transform_indices = @transform_2, window_bounds = array<i64: 1, 1, 128>}, {transform_indices = @transform_3, window_bounds = array<i64: 1, 8, 1>}, {pipeline_mode = #tpu.pipeline_mode<synchronous>, transform_indices = @transform_4, window_bounds = array<i64: 128, 128>}, {pipeline_mode = #tpu.pipeline_mode<synchronous>, transform_indices = @transform_5, window_bounds = array<i64: 128, 128>}, {pipeline_mode = #tpu.pipeline_mode<synchronous>, transform_indices = @transform_6, window_bounds = array<i64: 1, 128>}, {transform_indices = @transform_7, window_bounds = array<i64: 1, 8, 128>}]} {
    %c0 = arith.constant 0 : index
    %c0_0 = arith.constant 0 : index
    %c0_1 = arith.constant 0 : index
    %0 = vector.load %arg1[%c0, %c0_0, %c0_1] : memref<1x128x1xi32, #tpu.memory_space<vmem>>, vector<1x128x1xi32>
    %1 = tpu.iota {dimensions = array<i32: 2>} : vector<1x128x128xi32>
    %2 = vector.broadcast %0 : vector<1x128x1xi32> to vector<1x128x128xi32>
    %3 = arith.cmpi eq, %1, %2 : vector<1x128x128xi32>
    %4 = arith.extui %3 : vector<1x128x128xi1> to vector<1x128x128xi32>
    %5 = arith.sitofp %4 : vector<1x128x128xi32> to vector<1x128x128xf32>
    %6 = arith.truncf %5 : vector<1x128x128xf32> to vector<1x128x128xbf16>
    %7 = vector.shape_cast %6 : vector<1x128x128xbf16> to vector<128x128xbf16>
    %c0_2 = arith.constant 0 : index
    %c0_3 = arith.constant 0 : index
    %8 = vector.load %arg5[%c0_2, %c0_3] : memref<128x128xbf16, #tpu.memory_space<vmem>>, vector<128x128xbf16>
    %cst = arith.constant dense<0.000000e+00> : vector<128x128xf32>
    %9 = tpu.matmul %7, %8, %cst {dimension_numbers = #tpu.dot_dimension_numbers<[1], [0], [0], [1], [0, 0, 1, 1], [], []>} : vector<128x128xbf16>, vector<128x128xbf16>, vector<128x128xf32> -> vector<128x128xf32>
    %10 = arith.truncf %9 : vector<128x128xf32> to vector<128x128xbf16>
    %c0_4 = arith.constant 0 : index
    %c0_5 = arith.constant 0 : index
    %11 = vector.load %arg6[%c0_4, %c0_5] : memref<128x128xbf16, #tpu.memory_space<vmem>>, vector<128x128xbf16>
    %cst_6 = arith.constant dense<0.000000e+00> : vector<128x128xf32>
    %12 = tpu.matmul %10, %11, %cst_6 {dimension_numbers = #tpu.dot_dimension_numbers<[1], [0], [0], [1], [0, 0, 1, 1], [], []>} : vector<128x128xbf16>, vector<128x128xbf16>, vector<128x128xf32> -> vector<128x128xf32>
    %c0_7 = arith.constant 0 : index
    %c0_8 = arith.constant 0 : index
    %13 = vector.load %arg7[%c0_7, %c0_8] : memref<1x128xf32, #tpu.memory_space<vmem>>, vector<1x128xf32>
    %14 = vector.broadcast %13 : vector<1x128xf32> to vector<128x128xf32>
    %15 = arith.addf %12, %14 : vector<128x128xf32>
    %16 = math.tanh %15 : vector<128x128xf32>
    %17 = arith.truncf %16 : vector<128x128xf32> to vector<128x128xbf16>
    %18 = vector.shape_cast %17 : vector<128x128xbf16> to vector<1x128x128xbf16>
    %19 = tpu.iota {dimensions = array<i32: 1>} : vector<1x8x128xi32>
    %c0_9 = arith.constant 0 : index
    %c0_10 = arith.constant 0 : index
    %c0_11 = arith.constant 0 : index
    %20 = vector.load %arg2[%c0_9, %c0_10, %c0_11] : memref<1x1x128xi32, #tpu.memory_space<vmem>>, vector<1x1x128xi32>
    %21 = vector.broadcast %20 : vector<1x1x128xi32> to vector<1x8x128xi32>
    %22 = arith.cmpi eq, %19, %21 : vector<1x8x128xi32>
    %23 = arith.extui %22 : vector<1x8x128xi1> to vector<1x8x128xi32>
    %24 = arith.sitofp %23 : vector<1x8x128xi32> to vector<1x8x128xf32>
    %c0_12 = arith.constant 0 : index
    %c0_13 = arith.constant 0 : index
    %c0_14 = arith.constant 0 : index
    %25 = vector.load %arg4[%c0_12, %c0_13, %c0_14] : memref<1x8x1xf32, #tpu.memory_space<vmem>>, vector<1x8x1xf32>
    %26 = vector.broadcast %25 : vector<1x8x1xf32> to vector<1x8x128xf32>
    %27 = arith.mulf %24, %26 : vector<1x8x128xf32>
    %c4_i32 = arith.constant 4 : i32
    %28 = vector.broadcast %c4_i32 : i32 to vector<1x8x128xi32>
    %29 = arith.cmpi eq, %19, %28 : vector<1x8x128xi32>
    %30 = arith.extui %29 : vector<1x8x128xi1> to vector<1x8x128xi32>
    %31 = arith.sitofp %30 : vector<1x8x128xi32> to vector<1x8x128xf32>
    %c0_15 = arith.constant 0 : index
    %c0_16 = arith.constant 0 : index
    %c0_17 = arith.constant 0 : index
    %32 = vector.load %arg3[%c0_15, %c0_16, %c0_17] : memref<1x1x128xf32, #tpu.memory_space<vmem>>, vector<1x1x128xf32>
    %33 = vector.broadcast %32 : vector<1x1x128xf32> to vector<1x8x128xf32>
    %34 = arith.mulf %31, %33 : vector<1x8x128xf32>
    %35 = arith.addf %27, %34 : vector<1x8x128xf32>
    %36 = arith.truncf %35 : vector<1x8x128xf32> to vector<1x8x128xbf16>
    "tpu.trace_start"() <{level = 10 : i32, message = "bst,btd->bsd"}> : () -> ()
    %cst_18 = arith.constant dense<0.000000e+00> : vector<1x8x128xf32>
    %37 = tpu.matmul %36, %18, %cst_18 {dimension_numbers = #tpu.dot_dimension_numbers<[2], [1], [1], [2], [0, 0, 0, 1, 1, 2], [0], [0]>} : vector<1x8x128xbf16>, vector<1x128x128xbf16>, vector<1x8x128xf32> -> vector<1x8x128xf32>
    "tpu.trace_stop"() : () -> ()
    %c0_19 = arith.constant 0 : index
    %c0_20 = arith.constant 0 : index
    %c0_21 = arith.constant 0 : index
    %38 = vector.load %arg8[%c0_19, %c0_20, %c0_21] : memref<1x8x128xf32, #tpu.memory_space<vmem>>, vector<1x8x128xf32>
    tpu.vector_store %arg8[%c0_19, %c0_20, %c0_21], %37 {strides = array<i32>} : memref<1x8x128xf32, #tpu.memory_space<vmem>>, vector<1x8x128xf32>,
    return
  }
  func.func @transform_0(%arg0: i32) -> (i32, i32, i32) {
    %c0_i32 = arith.constant 0 : i32
    %c0_i32_0 = arith.constant 0 : i32
    %c0_i32_1 = arith.constant 0 : i32
    return %arg0, %c0_i32, %c0_i32_0 : i32, i32, i32
  }
  func.func @transform_1(%arg0: i32) -> (i32, i32, i32) {
    %c0_i32 = arith.constant 0 : i32
    %c0_i32_0 = arith.constant 0 : i32
    %c0_i32_1 = arith.constant 0 : i32
    return %arg0, %c0_i32, %c0_i32_0 : i32, i32, i32
  }
  func.func @transform_2(%arg0: i32) -> (i32, i32, i32) {
    %c0_i32 = arith.constant 0 : i32
    %c0_i32_0 = arith.constant 0 : i32
    %c0_i32_1 = arith.constant 0 : i32
    return %arg0, %c0_i32, %c0_i32_0 : i32, i32, i32
  }
  func.func @transform_3(%arg0: i32) -> (i32, i32, i32) {
    %c0_i32 = arith.constant 0 : i32
    %c0_i32_0 = arith.constant 0 : i32
    %c0_i32_1 = arith.constant 0 : i32
    return %arg0, %c0_i32, %c0_i32_0 : i32, i32, i32
  }
  func.func @transform_4(%arg0: i32) -> (i32, i32) {
    %c0_i32 = arith.constant 0 : i32
    %c0_i32_0 = arith.constant 0 : i32
    %c0_i32_1 = arith.constant 0 : i32
    return %c0_i32, %c0_i32_0 : i32, i32
  }
  func.func @transform_5(%arg0: i32) -> (i32, i32) {
    %c0_i32 = arith.constant 0 : i32
    %c0_i32_0 = arith.constant 0 : i32
    %c0_i32_1 = arith.constant 0 : i32
    return %c0_i32, %c0_i32_0 : i32, i32
  }
  func.func @transform_6(%arg0: i32) -> (i32, i32) {
    %c0_i32 = arith.constant 0 : i32
    %c0_i32_0 = arith.constant 0 : i32
    %c0_i32_1 = arith.constant 0 : i32
    return %c0_i32, %c0_i32_0 : i32, i32
  }
  func.func @transform_7(%arg0: i32) -> (i32, i32, i32) {
    %c0_i32 = arith.constant 0 : i32
    %c0_i32_0 = arith.constant 0 : i32
    %c0_i32_1 = arith.constant 0 : i32
    return %arg0, %c0_i32, %c0_i32_0 : i32, i32, i32
  }
}

</mosaic_0001>

<llo_original>
// kernel: tpu_custom_call.1
$region0: #{tpu_custom_call.1}
  #allocation0 [shape = 'u32[]', space=smem, size = 0x4, offset = 0x4, fixed_abs, tag = 'smem constant byte address 0x4 - core index']
  #allocation1 [shape = 'u32[144,128]{1,0:T(1,128)}', space=vmem, size = 0x12000, scoped, tag = 'internal scratch']
  %s0 = inlined_call_operand.vmem [shape: s32[2,128,1], index: 0, kind: input, shape index: {}]
  %s1 = inlined_call_operand.vmem [shape: s32[2,1,128], index: 1, kind: input, shape index: {}]
  %s2 = inlined_call_operand.vmem [shape: f32[2,1,128], index: 2, kind: input, shape index: {}]
  %s3 = inlined_call_operand.vmem [shape: f32[2,8,1], index: 3, kind: input, shape index: {}]
  %s4 = inlined_call_operand.vmem [shape: bf16[128,128], index: 4, kind: input, shape index: {}]
  %s5 = inlined_call_operand.vmem [shape: bf16[128,128], index: 5, kind: input, shape index: {}]
  %s6 = inlined_call_operand.vmem [shape: f32[1,128], index: 6, kind: input, shape index: {}]
  %s7 = inlined_call_operand.hbm [shape: f32[2,8,128], index: 7, kind: output, shape index: {}]
  %s8 = sld [smem:[#allocation0]]
  $region61: #{tpu_custom_call.1} parent=0
    _
  %s10 = ssub.s32 1, %s8
  %s11 = scalar_select 0, %s10, %s8
  $region1: #{tpu_custom_call.1} parent=0
    #allocation2 [shape = 'u8[8192]{0}', space=vmem, size = 0x2000, scoped, tag = 'output window, operand 0']
    #allocation3 [shape = 's32[2]{0}', space=sflag, size = 0x8, scoped, tag = 'scoped memory for tpu_custom_call.1']
    %12 = vsyncpa [#allocation3], 0
    %s13 = scalar_lea.sflag [#allocation3], 1
    %14 = vsyncpa %s13, 0
    loop: start=0, step=1, limit=4
    $region2: #{tpu_custom_call.1} parent=1 // loop_pre_header
      _
    $region3: #{tpu_custom_call.1} parent=1 // loop_header
      %s16 = sphi 0, %s20
      %p17 = scmp.ge.s32.totalorder %s16, 4
      %s26 = sphi 0, %s28
      %s29 = sphi 0, %s26
      %s30 = sphi 0, %s29
      %s46 = sphi 0, %s30
      %s52 = sphi 0, %s54
      %s55 = sphi 0, %s52
      %s56 = sphi 0, %s55
      %s72 = sphi 0, %s56
      %s78 = sphi 0, %s80
      %s81 = sphi 0, %s78
      %s82 = sphi 0, %s81
      %s98 = sphi 0, %s82
      %s104 = sphi 0, %s106
      %s107 = sphi 0, %s104
      %s108 = sphi 0, %s107
      %s124 = sphi 0, %s108
      %s128 = sphi 0, %s128
      %s130 = sphi 0, %s128
      %s131 = sphi 0, %s130
      %s145 = sphi 0, %s131
      %s149 = sphi 0, %s149
      %s151 = sphi 0, %s149
      %s152 = sphi 0, %s151
      %s166 = sphi 0, %s152
      %s170 = sphi 0, %s170
      %s172 = sphi 0, %s170
      %s173 = sphi 0, %s172
      %s187 = sphi 0, %s173
      %s193 = sphi 0, %s195
      %s196 = sphi 0, %s193
      %s197 = sphi 0, %s196
      %s213 = sphi 0, %s197
    $region4: #{tpu_custom_call.1} parent=1 // loop_header_branch
      %19 = sbr.rel (%p17) target = $region8
    $region5: #{tpu_custom_call.1} parent=1 // loop_body
      %s21 = ssub.s32 %s16, 1
      %s22 = ssub.s32 %s16, 2
      %s23 = sadd.s32 %s16, 1
      %s24 = ssub.s32 %s16, %s23
      %p25 = scmp.eq.s32.totalorder %s24, 0
      %s27 = sadd.s32 %s26, 1
      %s28 = scalar_select %p25, %s26, %s27
      %p31 = pneg %p25
      %p32 = scmp.eq.s32.totalorder %s16, 1
      %p33 = por %p31, %p32
      %p34 = scmp.ne.s32.totalorder %s26, %s29
      %p35 = scmp.eq.s32.totalorder %s16, 0
      %p36 = por %p34, %p35
      %p37 = scmp.ne.s32.totalorder %s26, %s29
      %p38 = scmp.eq.s32.totalorder %s21, 1
      %p39 = por %p37, %p38
      %p40 = scmp.ne.s32.totalorder %s29, %s30
      %p41 = scmp.eq.s32.totalorder %s21, 0
      %p42 = por %p40, %p41
      %p43 = scmp.ne.s32.totalorder %s29, %s30
      %p44 = scmp.eq.s32.totalorder %s22, 1
      %p45 = por %p43, %p44
      %p47 = scmp.ne.s32.totalorder %s30, %s46
      %p48 = scmp.eq.s32.totalorder %s22, 0
      %p49 = por %p47, %p48
      %s50 = ssub.s32 %s16, %s23
      %p51 = scmp.eq.s32.totalorder %s50, 0
      %s53 = sadd.s32 %s52, 1
      %s54 = scalar_select %p51, %s52, %s53
      %p57 = pneg %p51
      %p58 = scmp.eq.s32.totalorder %s16, 1
      %p59 = por %p57, %p58
      %p60 = scmp.ne.s32.totalorder %s52, %s55
      %p61 = scmp.eq.s32.totalorder %s16, 0
      %p62 = por %p60, %p61
      %p63 = scmp.ne.s32.totalorder %s52, %s55
      %p64 = scmp.eq.s32.totalorder %s21, 1
      %p65 = por %p63, %p64
      %p66 = scmp.ne.s32.totalorder %s55, %s56
      %p67 = scmp.eq.s32.totalorder %s21, 0
      %p68 = por %p66, %p67
      %p69 = scmp.ne.s32.totalorder %s55, %s56
      %p70 = scmp.eq.s32.totalorder %s22, 1
      %p71 = por %p69, %p70
      %p73 = scmp.ne.s32.totalorder %s56, %s72
      %p74 = scmp.eq.s32.totalorder %s22, 0
      %p75 = por %p73, %p74
      %s76 = ssub.s32 %s16, %s23
      %p77 = scmp.eq.s32.totalorder %s76, 0
      %s79 = sadd.s32 %s78, 1
      %s80 = scalar_select %p77, %s78, %s79
      %p83 = pneg %p77
      %p84 = scmp.eq.s32.totalorder %s16, 1
      %p85 = por %p83, %p84
      %p86 = scmp.ne.s32.totalorder %s78, %s81
      %p87 = scmp.eq.s32.totalorder %s16, 0
      %p88 = por %p86, %p87
      %p89 = scmp.ne.s32.totalorder %s78, %s81
      %p90 = scmp.eq.s32.totalorder %s21, 1
      %p91 = por %p89, %p90
      %p92 = scmp.ne.s32.totalorder %s81, %s82
      %p93 = scmp.eq.s32.totalorder %s21, 0
      %p94 = por %p92, %p93
      %p95 = scmp.ne.s32.totalorder %s81, %s82
      %p96 = scmp.eq.s32.totalorder %s22, 1
      %p97 = por %p95, %p96
      %p99 = scmp.ne.s32.totalorder %s82, %s98
      %p100 = scmp.eq.s32.totalorder %s22, 0
      %p101 = por %p99, %p100
      %s102 = ssub.s32 %s16, %s23
      %p103 = scmp.eq.s32.totalorder %s102, 0
      %s105 = sadd.s32 %s104, 1
      %s106 = scalar_select %p103, %s104, %s105
      %p109 = pneg %p103
      %p110 = scmp.eq.s32.totalorder %s16, 1
      %p111 = por %p109, %p110
      %p112 = scmp.ne.s32.totalorder %s104, %s107
      %p113 = scmp.eq.s32.totalorder %s16, 0
      %p114 = por %p112, %p113
      %p115 = scmp.ne.s32.totalorder %s104, %s107
      %p116 = scmp.eq.s32.totalorder %s21, 1
      %p117 = por %p115, %p116
      %p118 = scmp.ne.s32.totalorder %s107, %s108
      %p119 = scmp.eq.s32.totalorder %s21, 0
      %p120 = por %p118, %p119
      %p121 = scmp.ne.s32.totalorder %s107, %s108
      %p122 = scmp.eq.s32.totalorder %s22, 1
      %p123 = por %p121, %p122
      %p125 = scmp.ne.s32.totalorder %s108, %s124
      %p126 = scmp.eq.s32.totalorder %s22, 0
      %p127 = por %p125, %p126
      %s129 = sadd.s32 %s128, 1
      %p132 = scmp.eq.s32.totalorder %s16, 1
      %p133 = scmp.ne.s32.totalorder %s128, %s130
      %p134 = scmp.eq.s32.totalorder %s16, 0
      %p135 = por %p133, %p134
      %p136 = scmp.ne.s32.totalorder %s128, %s130
      %p137 = scmp.eq.s32.totalorder %s21, 1
      %p138 = por %p136, %p137
      %p139 = scmp.ne.s32.totalorder %s130, %s131
      %p140 = scmp.eq.s32.totalorder %s21, 0
      %p141 = por %p139, %p140
      %p142 = scmp.ne.s32.totalorder %s130, %s131
      %p143 = scmp.eq.s32.totalorder %s22, 1
      %p144 = por %p142, %p143
      %p146 = scmp.ne.s32.totalorder %s131, %s145
      %p147 = scmp.eq.s32.totalorder %s22, 0
      %p148 = por %p146, %p147
      %s150 = sadd.s32 %s149, 1
      %p153 = scmp.eq.s32.totalorder %s16, 1
      %p154 = scmp.ne.s32.totalorder %s149, %s151
      %p155 = scmp.eq.s32.totalorder %s16, 0
      %p156 = por %p154, %p155
      %p157 = scmp.ne.s32.totalorder %s149, %s151
      %p158 = scmp.eq.s32.totalorder %s21, 1
      %p159 = por %p157, %p158
      %p160 = scmp.ne.s32.totalorder %s151, %s152
      %p161 = scmp.eq.s32.totalorder %s21, 0
      %p162 = por %p160, %p161
      %p163 = scmp.ne.s32.totalorder %s151, %s152
      %p164 = scmp.eq.s32.totalorder %s22, 1
      %p165 = por %p163, %p164
      %p167 = scmp.ne.s32.totalorder %s152, %s166
      %p168 = scmp.eq.s32.totalorder %s22, 0
      %p169 = por %p167, %p168
      %s171 = sadd.s32 %s170, 1
      %p174 = scmp.eq.s32.totalorder %s16, 1
      %p175 = scmp.ne.s32.totalorder %s170, %s172
      %p176 = scmp.eq.s32.totalorder %s16, 0
      %p177 = por %p175, %p176
      %p178 = scmp.ne.s32.totalorder %s170, %s172
      %p179 = scmp.eq.s32.totalorder %s21, 1
      %p180 = por %p178, %p179
      %p181 = scmp.ne.s32.totalorder %s172, %s173
      %p182 = scmp.eq.s32.totalorder %s21, 0
      %p183 = por %p181, %p182
      %p184 = scmp.ne.s32.totalorder %s172, %s173
      %p185 = scmp.eq.s32.totalorder %s22, 1
      %p186 = por %p184, %p185
      %p188 = scmp.ne.s32.totalorder %s173, %s187
      %p189 = scmp.eq.s32.totalorder %s22, 0
      %p190 = por %p188, %p189
      %s191 = ssub.s32 %s16, %s23
      %p192 = scmp.eq.s32.totalorder %s191, 0
      %s194 = sadd.s32 %s193, 1
      %s195 = scalar_select %p192, %s193, %s194
      %p198 = pneg %p192
      %p199 = scmp.eq.s32.totalorder %s16, 1
      %p200 = por %p198, %p199
      %p201 = scmp.ne.s32.totalorder %s193, %s196
      %p202 = scmp.eq.s32.totalorder %s16, 0
      %p203 = por %p201, %p202
      %p204 = scmp.ne.s32.totalorder %s193, %s196
      %p205 = scmp.eq.s32.totalorder %s21, 1
      %p206 = por %p204, %p205
      %p207 = scmp.ne.s32.totalorder %s196, %s197
      %p208 = scmp.eq.s32.totalorder %s21, 0
      %p209 = por %p207, %p208
      %p210 = scmp.ne.s32.totalorder %s196, %s197
      %p211 = scmp.eq.s32.totalorder %s22, 1
      %p212 = por %p210, %p211
      %p214 = scmp.ne.s32.totalorder %s197, %s213
      %p215 = scmp.eq.s32.totalorder %s22, 0
      %p216 = por %p214, %p215
      %p217 = scmp.le.s32.totalorder 1, %s16
      %p218 = scmp.lt.s32.totalorder %s16, 3
      %p219 = pnand %p217, %p218
      %p220 = pneg %p219
      // Predicated region
      $region9: #{tpu_custom_call.1} parent=5 // pred_check
        _
      $region10: #{tpu_custom_call.1} parent=5 // pred_check_branch
        %222 = sbr.rel (%p219) target = $region12
      $region11: #{tpu_custom_call.1} parent=5 // pred_region
        %s223 = ssub.s32 %s16, 1
        // Predicated region
        $region13: #{tpu_custom_call.1} parent=11 // pred_check
          %p224 = pneg %p141
        $region14: #{tpu_custom_call.1} parent=11 // pred_check_branch
          %226 = sbr.rel (%p224) target = $region16
        $region15: #{tpu_custom_call.1} parent=11 // pred_region
          _
        $region16: #{tpu_custom_call.1} parent=11 // pred_fallthru
          _
        // Predicated region
        $region17: #{tpu_custom_call.1} parent=11 // pred_check
          %p227 = pneg %p162
        $region18: #{tpu_custom_call.1} parent=11 // pred_check_branch
          %229 = sbr.rel (%p227) target = $region20
        $region19: #{tpu_custom_call.1} parent=11 // pred_region
          _
        $region20: #{tpu_custom_call.1} parent=11 // pred_fallthru
          _
        // Predicated region
        $region21: #{tpu_custom_call.1} parent=11 // pred_check
          %p230 = pneg %p183
        $region22: #{tpu_custom_call.1} parent=11 // pred_check_branch
          %232 = sbr.rel (%p230) target = $region24
        $region23: #{tpu_custom_call.1} parent=11 // pred_region
          _
        $region24: #{tpu_custom_call.1} parent=11 // pred_fallthru
          _
      $region12: #{tpu_custom_call.1} parent=5 // pred_fallthru
        _
      %p233 = scmp.lt.s32.totalorder %s16, 2
      // Predicated region
      $region25: #{tpu_custom_call.1} parent=5 // pred_check
        %p234 = pneg %p233
      $region26: #{tpu_custom_call.1} parent=5 // pred_check_branch
        %236 = sbr.rel (%p234) target = $region28
      $region27: #{tpu_custom_call.1} parent=5 // pred_region
        // Predicated region
        $region29: #{tpu_custom_call.1} parent=27 // pred_check
          %p237 = pneg %p36
        $region30: #{tpu_custom_call.1} parent=27 // pred_check_branch
          %239 = sbr.rel (%p237) target = $region32
        $region31: #{tpu_custom_call.1} parent=27 // pred_region
          %p240 = scmp.lt.s32.totalorder %s16, 1
          %s241 = scalar_select %p240, %s16, 1
          %s242 = smul.addr %s241, 16
          %s243 = smul.addr %s242, 8
          %s244 = scalar_lea.vmem %s0, %s243
        $region32: #{tpu_custom_call.1} parent=27 // pred_fallthru
          _
        // Predicated region
        $region33: #{tpu_custom_call.1} parent=27 // pred_check
          %p245 = pneg %p62
        $region34: #{tpu_custom_call.1} parent=27 // pred_check_branch
          %247 = sbr.rel (%p245) target = $region36
        $region35: #{tpu_custom_call.1} parent=27 // pred_region
          %p248 = scmp.lt.s32.totalorder %s16, 1
          %s249 = scalar_select %p248, %s16, 1
          %s250 = scalar_lea.vmem %s1, %s249
        $region36: #{tpu_custom_call.1} parent=27 // pred_fallthru
          _
        // Predicated region
        $region37: #{tpu_custom_call.1} parent=27 // pred_check
          %p251 = pneg %p88
        $region38: #{tpu_custom_call.1} parent=27 // pred_check_branch
          %253 = sbr.rel (%p251) target = $region40
        $region39: #{tpu_custom_call.1} parent=27 // pred_region
          %p254 = scmp.lt.s32.totalorder %s16, 1
          %s255 = scalar_select %p254, %s16, 1
          %s256 = scalar_lea.vmem %s2, %s255
        $region40: #{tpu_custom_call.1} parent=27 // pred_fallthru
          _
        // Predicated region
        $region41: #{tpu_custom_call.1} parent=27 // pred_check
          %p257 = pneg %p114
        $region42: #{tpu_custom_call.1} parent=27 // pred_check_branch
          %259 = sbr.rel (%p257) target = $region44
        $region43: #{tpu_custom_call.1} parent=27 // pred_region
          %p260 = scmp.lt.s32.totalorder %s16, 1
          %s261 = scalar_select %p260, %s16, 1
          %s262 = smul.addr %s261, 8
          %s263 = scalar_lea.vmem %s3, %s262
        $region44: #{tpu_custom_call.1} parent=27 // pred_fallthru
          _
      $region28: #{tpu_custom_call.1} parent=5 // pred_fallthru
        _
      %p264 = scmp.le.s32.totalorder 1, %s16
      %p265 = scmp.lt.s32.totalorder %s16, 3
      %p266 = pnand %p264, %p265
      %p267 = pneg %p266
      // Predicated region
      $region45: #{tpu_custom_call.1} parent=5 // pred_check
        _
      $region46: #{tpu_custom_call.1} parent=5 // pred_check_branch
        %269 = sbr.rel (%p266) target = $region48
      $region47: #{tpu_custom_call.1} parent=5 // pred_region
        %s270 = ssub.s32 %s16, 1
        %p271 = scmp.lt.s32.totalorder %s21, 1
        %s272 = scalar_select %p271, %s21, 1
        %s273 = smul.addr %s272, 16
        %s274 = smul.addr %s273, 8
        %s275 = scalar_lea.vmem %s0, %s274
        %p276 = pneg %p42
        %p277 = pneg %p39
        %p278 = scmp.lt.s32.totalorder %s21, 1
        %s279 = scalar_select %p278, %s21, 1
        %s280 = scalar_lea.vmem %s1, %s279
        %p281 = pneg %p68
        %p282 = pneg %p65
        %p283 = scmp.lt.s32.totalorder %s21, 1
        %s284 = scalar_select %p283, %s21, 1
        %s285 = scalar_lea.vmem %s2, %s284
        %p286 = pneg %p94
        %p287 = pneg %p91
        %p288 = scmp.lt.s32.totalorder %s21, 1
        %s289 = scalar_select %p288, %s21, 1
        %s290 = smul.addr %s289, 8
        %s291 = scalar_lea.vmem %s3, %s290
        %p292 = pneg %p120
        %p293 = pneg %p117
        %p294 = pneg %p141
        %p295 = pneg %p138
        %p296 = pneg %p162
        %p297 = pneg %p159
        %p298 = pneg %p183
        %p299 = pneg %p180
        %p300 = pneg %p209
        %p301 = pneg %p206
        %s302 = sand.u32 %s196, 1
        %s303 = scalar_lea.sflag [#allocation3], %s302
        %s304 = sand.u32 %s196, 1
        %s305 = smul.addr %s304, 8
        %s306 = scalar_lea.vmem [#allocation2], %s305
        %p307 = scmp.lt.s32.totalorder %s21, 1
        %s308 = scalar_select %p307, %s21, 1
        %s309 = smul.addr %s308, 16
        %s310 = smul.addr %s309, 8
        %s311 = scalar_lea.vmem %s0, %s310
        %p312 = scmp.lt.s32.totalorder %s21, 1
        %s313 = scalar_select %p312, %s21, 1
        %s314 = scalar_lea.vmem %s1, %s313
        %p315 = scmp.lt.s32.totalorder %s21, 1
        %s316 = scalar_select %p315, %s21, 1
        %s317 = scalar_lea.vmem %s2, %s316
        %p318 = scmp.lt.s32.totalorder %s21, 1
        %s319 = scalar_select %p318, %s21, 1
        %s320 = smul.addr %s319, 8
        %s321 = scalar_lea.vmem %s3, %s320
        %v323 = vld [vmem:[%s311] sm:$0xff]
        %v324 = vld [vmem:[%s311 + $0x8] sm:$0xff]
        %v325 = vld [vmem:[%s311 + $0x10] sm:$0xff]
        %v326 = vld [vmem:[%s311 + $0x18] sm:$0xff]
        %v327 = vld [vmem:[%s311 + $0x20] sm:$0xff]
        %v328 = vld [vmem:[%s311 + $0x28] sm:$0xff]
        %v329 = vld [vmem:[%s311 + $0x30] sm:$0xff]
        %v330 = vld [vmem:[%s311 + $0x38] sm:$0xff]
        %v331 = vld [vmem:[%s311 + $0x40] sm:$0xff]
        %v332 = vld [vmem:[%s311 + $0x48] sm:$0xff]
        %v333 = vld [vmem:[%s311 + $0x50] sm:$0xff]
        %v334 = vld [vmem:[%s311 + $0x58] sm:$0xff]
        %v335 = vld [vmem:[%s311 + $0x60] sm:$0xff]
        %v336 = vld [vmem:[%s311 + $0x68] sm:$0xff]
        %v337 = vld [vmem:[%s311 + $0x70] sm:$0xff]
        %v338 = vld [vmem:[%s311 + $0x78] sm:$0xff]
        %v339 = vlaneseq
        %v340 = vand.u32 %v339, 127
        %341 = vset.pattern.permute.xlu0 0
        %342 = vperm.xlu0 %341, %v323
        %v343 = vpop.permute.xlu0 %342
        %344 = vset.pattern.permute.xlu0 0
        %345 = vperm.xlu0 %344, %v324
        %v346 = vpop.permute.xlu0 %345
        %347 = vset.pattern.permute.xlu0 0
        %348 = vperm.xlu0 %347, %v325
        %v349 = vpop.permute.xlu0 %348
        %350 = vset.pattern.permute.xlu0 0
        %351 = vperm.xlu0 %350, %v326
        %v352 = vpop.permute.xlu0 %351
        %353 = vset.pattern.permute.xlu0 0
        %354 = vperm.xlu0 %353, %v327
        %v355 = vpop.permute.xlu0 %354
        %356 = vset.pattern.permute.xlu0 0
        %357 = vperm.xlu0 %356, %v328
        %v358 = vpop.permute.xlu0 %357
        %359 = vset.pattern.permute.xlu0 0
        %360 = vperm.xlu0 %359, %v329
        %v361 = vpop.permute.xlu0 %360
        %362 = vset.pattern.permute.xlu0 0
        %363 = vperm.xlu0 %362, %v330
        %v364 = vpop.permute.xlu0 %363
        %365 = vset.pattern.permute.xlu0 0
        %366 = vperm.xlu0 %365, %v331
        %v367 = vpop.permute.xlu0 %366
        %368 = vset.pattern.permute.xlu0 0
        %369 = vperm.xlu0 %368, %v332
        %v370 = vpop.permute.xlu0 %369
        %371 = vset.pattern.permute.xlu0 0
        %372 = vperm.xlu0 %371, %v333
        %v373 = vpop.permute.xlu0 %372
        %374 = vset.pattern.permute.xlu0 0
        %375 = vperm.xlu0 %374, %v334
        %v376 = vpop.permute.xlu0 %375
        %377 = vset.pattern.permute.xlu0 0
        %378 = vperm.xlu0 %377, %v335
        %v379 = vpop.permute.xlu0 %378
        %380 = vset.pattern.permute.xlu0 0
        %381 = vperm.xlu0 %380, %v336
        %v382 = vpop.permute.xlu0 %381
        %383 = vset.pattern.permute.xlu0 0
        %384 = vperm.xlu0 %383, %v337
        %v385 = vpop.permute.xlu0 %384
        %386 = vset.pattern.permute.xlu0 0
        %387 = vperm.xlu0 %386, %v338
        %v388 = vpop.permute.xlu0 %387
        %vm389 = vcmp.eq.s32.totalorder %v340, %v343
        %vm390 = vcmp.eq.s32.totalorder %v340, %v346
        %vm391 = vcmp.eq.s32.totalorder %v340, %v349
        %vm392 = vcmp.eq.s32.totalorder %v340, %v352
        %vm393 = vcmp.eq.s32.totalorder %v340, %v355
        %vm394 = vcmp.eq.s32.totalorder %v340, %v358
        %vm395 = vcmp.eq.s32.totalorder %v340, %v361
        %vm396 = vcmp.eq.s32.totalorder %v340, %v364
        %vm397 = vcmp.eq.s32.totalorder %v340, %v367
        %vm398 = vcmp.eq.s32.totalorder %v340, %v370
        %vm399 = vcmp.eq.s32.totalorder %v340, %v373
        %vm400 = vcmp.eq.s32.totalorder %v340, %v376
        %vm401 = vcmp.eq.s32.totalorder %v340, %v379
        %vm402 = vcmp.eq.s32.totalorder %v340, %v382
        %vm403 = vcmp.eq.s32.totalorder %v340, %v385
        %vm404 = vcmp.eq.s32.totalorder %v340, %v388
        %v405 = vsel %vm389, 1, 0
        %v406 = vsel %vm390, 1, 0
        %v407 = vsel %vm391, 1, 0
        %v408 = vsel %vm392, 1, 0
        %v409 = vsel %vm393, 1, 0
        %v410 = vsel %vm394, 1, 0
        %v411 = vsel %vm395, 1, 0
        %v412 = vsel %vm396, 1, 0
        %v413 = vsel %vm397, 1, 0
        %v414 = vsel %vm398, 1, 0
        %v415 = vsel %vm399, 1, 0
        %v416 = vsel %vm400, 1, 0
        %v417 = vsel %vm401, 1, 0
        %v418 = vsel %vm402, 1, 0
        %v419 = vsel %vm403, 1, 0
        %v420 = vsel %vm404, 1, 0
        %v421 = vcvt.s32.f32 %v405
        %v422 = vcvt.s32.f32 %v406
        %v423 = vcvt.s32.f32 %v407
        %v424 = vcvt.s32.f32 %v408
        %v425 = vcvt.s32.f32 %v409
        %v426 = vcvt.s32.f32 %v410
        %v427 = vcvt.s32.f32 %v411
        %v428 = vcvt.s32.f32 %v412
        %v429 = vcvt.s32.f32 %v413
        %v430 = vcvt.s32.f32 %v414
        %v431 = vcvt.s32.f32 %v415
        %v432 = vcvt.s32.f32 %v416
        %v433 = vcvt.s32.f32 %v417
        %v434 = vcvt.s32.f32 %v418
        %v435 = vcvt.s32.f32 %v419
        %v436 = vcvt.s32.f32 %v420
        %v437 = vpack.c.bf16 %v422, %v421
        %v438 = vpack.c.bf16 %v424, %v423
        %v439 = vpack.c.bf16 %v426, %v425
        %v440 = vpack.c.bf16 %v428, %v427
        %v441 = vpack.c.bf16 %v430, %v429
        %v442 = vpack.c.bf16 %v432, %v431
        %v443 = vpack.c.bf16 %v434, %v433
        %v444 = vpack.c.bf16 %v436, %v435
        %v445 = vld [vmem:[%s4] sm:$0xf]
        %v446 = vld [vmem:[%s4 + $0x4] sm:$0xf]
        %v447 = vld [vmem:[%s4 + $0x8] sm:$0xf]
        %v448 = vld [vmem:[%s4 + $0xc] sm:$0xf]
        %v449 = vld [vmem:[%s4 + $0x10] sm:$0xf]
        %v450 = vld [vmem:[%s4 + $0x14] sm:$0xf]
        %v451 = vld [vmem:[%s4 + $0x18] sm:$0xf]
        %v452 = vld [vmem:[%s4 + $0x1c] sm:$0xf]
        %v453 = vld [vmem:[%s4 + $0x20] sm:$0xf]
        %v454 = vld [vmem:[%s4 + $0x24] sm:$0xf]
        %v455 = vld [vmem:[%s4 + $0x28] sm:$0xf]
        %v456 = vld [vmem:[%s4 + $0x2c] sm:$0xf]
        %v457 = vld [vmem:[%s4 + $0x30] sm:$0xf]
        %v458 = vld [vmem:[%s4 + $0x34] sm:$0xf]
        %v459 = vld [vmem:[%s4 + $0x38] sm:$0xf]
        %v460 = vld [vmem:[%s4 + $0x3c] sm:$0xf]
        %v477 = vunpack.c.l.b16 %v445
        %v478 = vunpack.c.l.b16 %v446
        %v479 = vunpack.c.l.b16 %v447
        %v480 = vunpack.c.l.b16 %v448
        %v481 = vunpack.c.l.b16 %v449
        %v482 = vunpack.c.l.b16 %v450
        %v483 = vunpack.c.l.b16 %v451
        %v484 = vunpack.c.l.b16 %v452
        %v485 = vunpack.c.l.b16 %v453
        %v486 = vunpack.c.l.b16 %v454
        %v487 = vunpack.c.l.b16 %v455
        %v488 = vunpack.c.l.b16 %v456
        %v489 = vunpack.c.l.b16 %v457
        %v490 = vunpack.c.l.b16 %v458
        %v491 = vunpack.c.l.b16 %v459
        %v492 = vunpack.c.l.b16 %v460
        %v493 = vpack.c.b16 %v478, %v477
        %v494 = vpack.c.b16 %v480, %v479
        %v495 = vpack.c.b16 %v482, %v481
        %v496 = vpack.c.b16 %v484, %v483
        %v497 = vpack.c.b16 %v486, %v485
        %v498 = vpack.c.b16 %v488, %v487
        %v499 = vpack.c.b16 %v490, %v489
        %v500 = vpack.c.b16 %v492, %v491
        %509 = vmatprep.subr.bf16.mxu0 0
        %510 = vmatpush1.bf16.msra.mxu0 %v500
        %511 = vmatprep.subr.bf16.mxu0 0
        %512 = vmatpush1.bf16.msra.mxu0 %v499
        %513 = vmatprep.subr.bf16.mxu0 0
        %514 = vmatpush1.bf16.msra.mxu0 %v498
        %515 = vmatprep.subr.bf16.mxu0 0
        %516 = vmatpush1.bf16.msra.mxu0 %v497
        %517 = vmatprep.subr.bf16.mxu0 0
        %518 = vmatpush1.bf16.msra.mxu0 %v496
        %519 = vmatprep.subr.bf16.mxu0 0
        %520 = vmatpush1.bf16.msra.mxu0 %v495
        %521 = vmatprep.subr.bf16.mxu0 0
        %522 = vmatpush1.bf16.msra.mxu0 %v494
        %523 = vmatprep.subr.bf16.mxu0 0
        %524 = vmatpush1.bf16.msra.mxu0 %v493
        %525 = vmatprep.subr.bf16.mxu0 0
        %526 = vmatpush2.bf16.msra.mxu0 0
        %527 = vmatprep.subr.bf16.mxu0 0
        %528 = vmatpush2.bf16.msra.mxu0 0
        %529 = vmatprep.subr.bf16.mxu0 0
        %530 = vmatpush2.bf16.msra.mxu0 0
        %531 = vmatprep.subr.bf16.mxu0 0
        %532 = vmatpush2.bf16.msra.mxu0 0
        %533 = vmatprep.subr.bf16.mxu0 0
        %534 = vmatpush2.bf16.msra.mxu0 0
        %535 = vmatprep.subr.bf16.mxu0 0
        %536 = vmatpush2.bf16.msra.mxu0 0
        %537 = vmatprep.subr.bf16.mxu0 0
        %538 = vmatpush2.bf16.msra.mxu0 0
        %539 = vmatprep.subr.bf16.mxu0 0
        %540 = vmatpush2.bf16.msra.mxu0 0
        %541 = vmatprep.mubr.bf16.mxu0 0
        %542 = vmatmul.mubr.bf16.gmra.mxu0 %v437
        %v543 = vpop.f32.mrf.mxu0
        %v544 = vadd.f32 0.0, %v543
        %v545 = vpop.f32.mrf.mxu0
        %v546 = vpop.f32.mrf.mxu0
        %v547 = vadd.f32 0.0, %v546
        %v548 = vpop.f32.mrf.mxu0
        %549 = vmatprep.mubr.bf16.mxu0 0
        %550 = vmatmul.mubr.bf16.gmra.mxu0 %v438
        %v551 = vpop.f32.mrf.mxu0
        %v552 = vadd.f32 0.0, %v551
        %v553 = vpop.f32.mrf.mxu0
        %v554 = vpop.f32.mrf.mxu0
        %v555 = vadd.f32 0.0, %v554
        %v556 = vpop.f32.mrf.mxu0
        %557 = vmatprep.mubr.bf16.mxu0 0
        %558 = vmatmul.mubr.bf16.gmra.mxu0 %v439
        %v559 = vpop.f32.mrf.mxu0
        %v560 = vadd.f32 0.0, %v559
        %v561 = vpop.f32.mrf.mxu0
        %v562 = vpop.f32.mrf.mxu0
        %v563 = vadd.f32 0.0, %v562
        %v564 = vpop.f32.mrf.mxu0
        %565 = vmatprep.mubr.bf16.mxu0 0
        %566 = vmatmul.mubr.bf16.gmra.mxu0 %v440
        %v567 = vpop.f32.mrf.mxu0
        %v568 = vadd.f32 0.0, %v567
        %v569 = vpop.f32.mrf.mxu0
        %v570 = vpop.f32.mrf.mxu0
        %v571 = vadd.f32 0.0, %v570
        %v572 = vpop.f32.mrf.mxu0
        %573 = vmatprep.mubr.bf16.mxu0 0
        %574 = vmatmul.mubr.bf16.gmra.mxu0 %v441
        %v575 = vpop.f32.mrf.mxu0
        %v576 = vadd.f32 0.0, %v575
        %v577 = vpop.f32.mrf.mxu0
        %v578 = vpop.f32.mrf.mxu0
        %v579 = vadd.f32 0.0, %v578
        %v580 = vpop.f32.mrf.mxu0
        %581 = vmatprep.mubr.bf16.mxu0 0
        %582 = vmatmul.mubr.bf16.gmra.mxu0 %v442
        %v583 = vpop.f32.mrf.mxu0
        %v584 = vadd.f32 0.0, %v583
        %v585 = vpop.f32.mrf.mxu0
        %v586 = vpop.f32.mrf.mxu0
        %v587 = vadd.f32 0.0, %v586
        %v588 = vpop.f32.mrf.mxu0
        %589 = vmatprep.mubr.bf16.mxu0 0
        %590 = vmatmul.mubr.bf16.gmra.mxu0 %v443
        %v591 = vpop.f32.mrf.mxu0
        %v592 = vadd.f32 0.0, %v591
        %v593 = vpop.f32.mrf.mxu0
        %v594 = vpop.f32.mrf.mxu0
        %v595 = vadd.f32 0.0, %v594
        %v596 = vpop.f32.mrf.mxu0
        %597 = vmatprep.mubr.bf16.mxu0 0
        %598 = vmatmul.mubr.bf16.gmra.mxu0 %v444
        %v599 = vpop.f32.mrf.mxu0
        %v600 = vadd.f32 0.0, %v599
        %v601 = vpop.f32.mrf.mxu0
        %v602 = vpop.f32.mrf.mxu0
        %v603 = vadd.f32 0.0, %v602
        %v604 = vpop.f32.mrf.mxu0
        %605 = vdwg.mxu0
        %v606 = vpack.c.bf16 %v547, %v544
        %v607 = vpack.c.bf16 %v555, %v552
        %v608 = vpack.c.bf16 %v563, %v560
        %v609 = vpack.c.bf16 %v571, %v568
        %v610 = vpack.c.bf16 %v579, %v576
        %v611 = vpack.c.bf16 %v587, %v584
        %v612 = vpack.c.bf16 %v595, %v592
        %v613 = vpack.c.bf16 %v603, %v600
        %v614 = vld [vmem:[%s5] sm:$0xf]
        %v615 = vld [vmem:[%s5 + $0x4] sm:$0xf]
        %v616 = vld [vmem:[%s5 + $0x8] sm:$0xf]
        %v617 = vld [vmem:[%s5 + $0xc] sm:$0xf]
        %v618 = vld [vmem:[%s5 + $0x10] sm:$0xf]
        %v619 = vld [vmem:[%s5 + $0x14] sm:$0xf]
        %v620 = vld [vmem:[%s5 + $0x18] sm:$0xf]
        %v621 = vld [vmem:[%s5 + $0x1c] sm:$0xf]
        %v622 = vld [vmem:[%s5 + $0x20] sm:$0xf]
        %v623 = vld [vmem:[%s5 + $0x24] sm:$0xf]
        %v624 = vld [vmem:[%s5 + $0x28] sm:$0xf]
        %v625 = vld [vmem:[%s5 + $0x2c] sm:$0xf]
        %v626 = vld [vmem:[%s5 + $0x30] sm:$0xf]
        %v627 = vld [vmem:[%s5 + $0x34] sm:$0xf]
        %v628 = vld [vmem:[%s5 + $0x38] sm:$0xf]
        %v629 = vld [vmem:[%s5 + $0x3c] sm:$0xf]
        %v630 = vld [vmem:[%s6] sm:$0x1]
        %v632 = vlaneseq
        %v633 = vshrl.u32 %v632, 7
        %v634 = vsub.s32 0, %v633
        %v635 = vrot.slane %v630, %v634
        %v653 = vunpack.c.l.b16 %v614
        %v654 = vunpack.c.l.b16 %v615
        %v655 = vunpack.c.l.b16 %v616
        %v656 = vunpack.c.l.b16 %v617
        %v657 = vunpack.c.l.b16 %v618
        %v658 = vunpack.c.l.b16 %v619
        %v659 = vunpack.c.l.b16 %v620
        %v660 = vunpack.c.l.b16 %v621
        %v661 = vunpack.c.l.b16 %v622
        %v662 = vunpack.c.l.b16 %v623
        %v663 = vunpack.c.l.b16 %v624
        %v664 = vunpack.c.l.b16 %v625
        %v665 = vunpack.c.l.b16 %v626
        %v666 = vunpack.c.l.b16 %v627
        %v667 = vunpack.c.l.b16 %v628
        %v668 = vunpack.c.l.b16 %v629
        %v669 = vpack.c.b16 %v654, %v653
        %v670 = vpack.c.b16 %v656, %v655
        %v671 = vpack.c.b16 %v658, %v657
        %v672 = vpack.c.b16 %v660, %v659
        %v673 = vpack.c.b16 %v662, %v661
        %v674 = vpack.c.b16 %v664, %v663
        %v675 = vpack.c.b16 %v666, %v665
        %v676 = vpack.c.b16 %v668, %v667
        %685 = vmatprep.subr.bf16.mxu0 0
        %686 = vmatpush1.bf16.msra.mxu0 %v676
        %687 = vmatprep.subr.bf16.mxu0 0
        %688 = vmatpush1.bf16.msra.mxu0 %v675
        %689 = vmatprep.subr.bf16.mxu0 0
        %690 = vmatpush1.bf16.msra.mxu0 %v674
        %691 = vmatprep.subr.bf16.mxu0 0
        %692 = vmatpush1.bf16.msra.mxu0 %v673
        %693 = vmatprep.subr.bf16.mxu0 0
        %694 = vmatpush1.bf16.msra.mxu0 %v672
        %695 = vmatprep.subr.bf16.mxu0 0
        %696 = vmatpush1.bf16.msra.mxu0 %v671
        %697 = vmatprep.subr.bf16.mxu0 0
        %698 = vmatpush1.bf16.msra.mxu0 %v670
        %699 = vmatprep.subr.bf16.mxu0 0
        %700 = vmatpush1.bf16.msra.mxu0 %v669
        %701 = vmatprep.subr.bf16.mxu0 0
        %702 = vmatpush2.bf16.msra.mxu0 0
        %703 = vmatprep.subr.bf16.mxu0 0
        %704 = vmatpush2.bf16.msra.mxu0 0
        %705 = vmatprep.subr.bf16.mxu0 0
        %706 = vmatpush2.bf16.msra.mxu0 0
        %707 = vmatprep.subr.bf16.mxu0 0
        %708 = vmatpush2.bf16.msra.mxu0 0
        %709 = vmatprep.subr.bf16.mxu0 0
        %710 = vmatpush2.bf16.msra.mxu0 0
        %711 = vmatprep.subr.bf16.mxu0 0
        %712 = vmatpush2.bf16.msra.mxu0 0
        %713 = vmatprep.subr.bf16.mxu0 0
        %714 = vmatpush2.bf16.msra.mxu0 0
        %715 = vmatprep.subr.bf16.mxu0 0
        %716 = vmatpush2.bf16.msra.mxu0 0
        %717 = vmatprep.mubr.bf16.mxu0 0
        %718 = vmatmul.mubr.bf16.gmra.mxu0 %v606
        %v719 = vpop.f32.mrf.mxu0
        %v720 = vadd.f32 %v635, %v719
        %v721 = vpop.f32.mrf.mxu0
        %v722 = vpop.f32.mrf.mxu0
        %v723 = vadd.f32 %v635, %v722
        %v724 = vpop.f32.mrf.mxu0
        %725 = vmatprep.mubr.bf16.mxu0 0
        %726 = vmatmul.mubr.bf16.gmra.mxu0 %v607
        %v727 = vpop.f32.mrf.mxu0
        %v728 = vadd.f32 %v635, %v727
        %v729 = vpop.f32.mrf.mxu0
        %v730 = vpop.f32.mrf.mxu0
        %v731 = vadd.f32 %v635, %v730
        %v732 = vpop.f32.mrf.mxu0
        %733 = vmatprep.mubr.bf16.mxu0 0
        %734 = vmatmul.mubr.bf16.gmra.mxu0 %v608
        %v735 = vpop.f32.mrf.mxu0
        %v736 = vadd.f32 %v635, %v735
        %v737 = vpop.f32.mrf.mxu0
        %v738 = vpop.f32.mrf.mxu0
        %v739 = vadd.f32 %v635, %v738
        %v740 = vpop.f32.mrf.mxu0
        %741 = vmatprep.mubr.bf16.mxu0 0
        %742 = vmatmul.mubr.bf16.gmra.mxu0 %v609
        %v743 = vpop.f32.mrf.mxu0
        %v744 = vadd.f32 %v635, %v743
        %v745 = vpop.f32.mrf.mxu0
        %v746 = vpop.f32.mrf.mxu0
        %v747 = vadd.f32 %v635, %v746
        %v748 = vpop.f32.mrf.mxu0
        %749 = vmatprep.mubr.bf16.mxu0 0
        %750 = vmatmul.mubr.bf16.gmra.mxu0 %v610
        %v751 = vpop.f32.mrf.mxu0
        %v752 = vadd.f32 %v635, %v751
        %v753 = vpop.f32.mrf.mxu0
        %v754 = vpop.f32.mrf.mxu0
        %v755 = vadd.f32 %v635, %v754
        %v756 = vpop.f32.mrf.mxu0
        %757 = vmatprep.mubr.bf16.mxu0 0
        %758 = vmatmul.mubr.bf16.gmra.mxu0 %v611
        %v759 = vpop.f32.mrf.mxu0
        %v760 = vadd.f32 %v635, %v759
        %v761 = vpop.f32.mrf.mxu0
        %v762 = vpop.f32.mrf.mxu0
        %v763 = vadd.f32 %v635, %v762
        %v764 = vpop.f32.mrf.mxu0
        %765 = vmatprep.mubr.bf16.mxu0 0
        %766 = vmatmul.mubr.bf16.gmra.mxu0 %v612
        %v767 = vpop.f32.mrf.mxu0
        %v768 = vadd.f32 %v635, %v767
        %v769 = vpop.f32.mrf.mxu0
        %v770 = vpop.f32.mrf.mxu0
        %v771 = vadd.f32 %v635, %v770
        %v772 = vpop.f32.mrf.mxu0
        %773 = vmatprep.mubr.bf16.mxu0 0
        %774 = vmatmul.mubr.bf16.gmra.mxu0 %v613
        %v775 = vpop.f32.mrf.mxu0
        %v776 = vadd.f32 %v635, %v775
        %v777 = vpop.f32.mrf.mxu0
        %v778 = vpop.f32.mrf.mxu0
        %v779 = vadd.f32 %v635, %v778
        %v780 = vpop.f32.mrf.mxu0
        %781 = vdwg.mxu0
        %v782 = vtanh.pop %v720
        %v783 = vtanh.pop %v723
        %v784 = vtanh.pop %v728
        %v785 = vtanh.pop %v731
        %v786 = vtanh.pop %v736
        %v787 = vtanh.pop %v739
        %v788 = vtanh.pop %v744
        %v789 = vtanh.pop %v747
        %v790 = vtanh.pop %v752
        %v791 = vtanh.pop %v755
        %v792 = vtanh.pop %v760
        %v793 = vtanh.pop %v763
        %v794 = vtanh.pop %v768
        %v795 = vtanh.pop %v771
        %v796 = vtanh.pop %v776
        %v797 = vtanh.pop %v779
        %v798 = vpack.c.bf16 %v783, %v782
        %v799 = vpack.c.bf16 %v785, %v784
        %v800 = vpack.c.bf16 %v787, %v786
        %v801 = vpack.c.bf16 %v789, %v788
        %v802 = vpack.c.bf16 %v791, %v790
        %v803 = vpack.c.bf16 %v793, %v792
        %v804 = vpack.c.bf16 %v795, %v794
        %v805 = vpack.c.bf16 %v797, %v796
        %v806 = vlaneseq
        %v807 = vshrl.u32 %v806, 7
        %v808 = vld [vmem:[%s314] sm:$0x1]
        %v809 = vlaneseq
        %v810 = vshrl.u32 %v809, 7
        %v811 = vsub.s32 0, %v810
        %v812 = vrot.slane %v808, %v811
        %vm813 = vcmp.eq.s32.totalorder %v807, %v812
        %v814 = vsel %vm813, 1, 0
        %v815 = vcvt.s32.f32 %v814
        %v816 = vld [vmem:[%s321] sm:$0xff]
        %818 = vset.pattern.permute.xlu0 0
        %819 = vperm.xlu0 %818, %v816
        %v820 = vpop.permute.xlu0 %819
        %v822 = vmul.f32 %v815, %v820
        %vm823 = vcmp.eq.s32.totalorder %v807, 4
        %v824 = vsel %vm823, 1, 0
        %v825 = vcvt.s32.f32 %v824
        %v826 = vld [vmem:[%s317] sm:$0x1]
        %v828 = vlaneseq
        %v829 = vshrl.u32 %v828, 7
        %v830 = vsub.s32 0, %v829
        %v831 = vrot.slane %v826, %v830
        %v833 = vmul.f32 %v825, %v831
        %v834 = vadd.f32 %v822, %v833
        %v835 = vpack.c.bf16 %v834, %v834
        %836 = vmatprep.subr.bf16.mxu0 0
        %837 = vmatpush1.bf16.msra.mxu0 %v805
        %838 = vmatprep.subr.bf16.mxu0 0
        %839 = vmatpush1.bf16.msra.mxu0 %v804
        %840 = vmatprep.subr.bf16.mxu0 0
        %841 = vmatpush1.bf16.msra.mxu0 %v803
        %842 = vmatprep.subr.bf16.mxu0 0
        %843 = vmatpush1.bf16.msra.mxu0 %v802
        %844 = vmatprep.subr.bf16.mxu0 0
        %845 = vmatpush1.bf16.msra.mxu0 %v801
        %846 = vmatprep.subr.bf16.mxu0 0
        %847 = vmatpush1.bf16.msra.mxu0 %v800
        %848 = vmatprep.subr.bf16.mxu0 0
        %849 = vmatpush1.bf16.msra.mxu0 %v799
        %850 = vmatprep.subr.bf16.mxu0 0
        %851 = vmatpush1.bf16.msra.mxu0 %v798
        %852 = vmatprep.subr.bf16.mxu0 0
        %853 = vmatpush2.bf16.msra.mxu0 0
        %854 = vmatprep.subr.bf16.mxu0 0
        %855 = vmatpush2.bf16.msra.mxu0 0
        %856 = vmatprep.subr.bf16.mxu0 0
        %857 = vmatpush2.bf16.msra.mxu0 0
        %858 = vmatprep.subr.bf16.mxu0 0
        %859 = vmatpush2.bf16.msra.mxu0 0
        %860 = vmatprep.subr.bf16.mxu0 0
        %861 = vmatpush2.bf16.msra.mxu0 0
        %862 = vmatprep.subr.bf16.mxu0 0
        %863 = vmatpush2.bf16.msra.mxu0 0
        %864 = vmatprep.subr.bf16.mxu0 0
        %865 = vmatpush2.bf16.msra.mxu0 0
        %866 = vmatprep.subr.bf16.mxu0 0
        %867 = vmatpush2.bf16.msra.mxu0 0
        %868 = vmatprep.mubr.bf16.mxu0 0
        %869 = vmatmul.mubr.bf16.gmra.mxu0 %v835
        %v870 = vpop.f32.mrf.mxu0
        %v871 = vadd.f32 0.0, %v870
        %v872 = vpop.f32.mrf.mxu0
        %v873 = vpop.f32.mrf.mxu0
        %v874 = vpop.f32.mrf.mxu0
        %875 = vdwg.mxu0
        %876 = vst [vmem:[%s306] sm:$0xff] %v871
        %s877 = sand.u32 %s196, 1
        %s878 = scalar_lea.sflag [#allocation3], %s877
        %s879 = sand.u32 %s196, 1
        %s880 = smul.addr %s879, 8
        %s881 = scalar_lea.vmem [#allocation2], %s880
        // Predicated region
        $region49: #{tpu_custom_call.1} parent=47 // pred_check
          %p882 = pneg %p206
        $region50: #{tpu_custom_call.1} parent=47 // pred_check_branch
          %884 = sbr.rel (%p882) target = $region52
        $region51: #{tpu_custom_call.1} parent=47 // pred_region
          %s886 = ssub.s32 128, 128
          %887 = vsyncadd %s878, %s886
          %s888 = smul.addr %s21, 128
          %s889 = scalar_lea.hbm %s7, %s888
          %s891 = sshll.u32 %s881, 4
          %s892 = int_to_ptr.vmem [resolvable:$true] %s891
          %894 = dma.vmem_to_hbm [thread:$0]  %s892, 128, %s889, %s878
        $region52: #{tpu_custom_call.1} parent=47 // pred_fallthru
          _
      $region48: #{tpu_custom_call.1} parent=5 // pred_fallthru
        _
      %p895 = scmp.le.s32.totalorder 2, %s16
      // Predicated region
      $region53: #{tpu_custom_call.1} parent=5 // pred_check
        %p896 = pneg %p895
      $region54: #{tpu_custom_call.1} parent=5 // pred_check_branch
        %898 = sbr.rel (%p896) target = $region56
      $region55: #{tpu_custom_call.1} parent=5 // pred_region
        %s899 = ssub.s32 %s16, 2
        // Predicated region
        $region57: #{tpu_custom_call.1} parent=55 // pred_check
          %p900 = pneg %p212
        $region58: #{tpu_custom_call.1} parent=55 // pred_check_branch
          %902 = sbr.rel (%p900) target = $region60
        $region59: #{tpu_custom_call.1} parent=55 // pred_region
          %s903 = sand.u32 %s197, 1
          %s904 = scalar_lea.sflag [#allocation3], %s903
          %s905 = sand.u32 %s197, 1
          %s906 = smul.addr %s905, 8
          %s907 = scalar_lea.vmem [#allocation2], %s906
          %908 = dma.done %s904, 128
        $region60: #{tpu_custom_call.1} parent=55 // pred_fallthru
          _
      $region56: #{tpu_custom_call.1} parent=5 // pred_fallthru
        _
    $region6: #{tpu_custom_call.1} parent=1 // loop_footer
      %s20 = sadd.s32 1, %s16
    $region7: #{tpu_custom_call.1} parent=1 // loop_footer_branch
      %15 = sbr.rel target = $region3
    $region8: #{tpu_custom_call.1} parent=1 // loop_exit
      _
    %909 = vsyncpa [#allocation3], 1
    %s910 = scalar_lea.sflag [#allocation3], 1
    %911 = vsyncpa %s910, 1

</llo_original>
